<compile_context>
chip_gen: v6e
topology: v6e:2x2x1
jax: 0.10.0
libtpu: 0.0.40
codegen_flags: <defaults>
</compile_context>

<pallas_src>
import functools
import math

import jax
import jax.numpy as jnp
from jax.experimental import pallas as pl
from jax.experimental.pallas import tpu as pltpu


def _arcface_kernel(emb_ref, w_ref, label_ref, out_ref, *,
                    scale, cos_m, sin_m, th, mm, block_c):
    # emb_ref:   (TB, E) bf16, rows L2-normalized in the wrapper
    # w_ref:     (E, TN) bf16, columns L2-normalized in the wrapper
    # label_ref: (TB, 1) int32
    # out_ref:   (TB, TN) f32

    # MXU: (TB, E) x (E, TN) -> (TB, TN), f32 accumulation.
    cosine = jnp.dot(emb_ref[...], w_ref[...],
                     preferred_element_type=jnp.float32)

    tb, tn = out_ref.shape
    col0 = pl.program_id(0) * block_c                      # global class offset
    class_ids = col0 + jax.lax.broadcasted_iota(jnp.int32, (tb, tn), 1)
    is_label = class_ids == label_ref[...]                 # (TB, TN) bool

    # Per-row cosine at the label column (0 if the label is not in this tile;
    # in that case the phi value is never selected below).
    cos_t = jnp.sum(jnp.where(is_label, cosine, 0.0), axis=1, keepdims=True)
    sin_t = jnp.sqrt(jnp.maximum(1.0 - cos_t * cos_t, 0.0))
    phi_t = cos_t * cos_m - sin_t * sin_m
    phi_t = jnp.where(cos_t > th, phi_t, cos_t - mm)       # (TB, 1)

    out_ref[...] = (scale * jnp.where(is_label, phi_t, cosine)).astype(
        out_ref.dtype)


def _round_up(x, n):
    return -(-x // n) * n


def _vmem_bytes(tb, tn, e_pad):
    # double-buffered: weight tile (bf16) + emb tile (bf16) + out tile (f32) + labels
    return 2 * (tn * e_pad * 2 + tb * e_pad * 2 + tb * tn * 4 + tb * 4)


def margin_head_forward(emb, weight, label, *, scale=64, m=0.5,
                        block_b=1024, block_c=2048, eps=1e-12):
    """MarginHead.forward: returns None when label is None, else margin logits."""
    if label is None:
        return None

    B, E = emb.shape
    C, E2 = weight.shape
    assert E == E2

    E_pad = _round_up(E, 128)

    # Tile sizes: batch tile rounded to 16 (bf16 sublane packing) and covering
    # the whole batch by default; lane-dense class tile (multiple of 128).
    tb = min(_round_up(B, 16), _round_up(block_b, 16))
    tn = min(_round_up(C, 128), _round_up(block_c, 128))

    # Keep the working set comfortably inside scoped VMEM (safe for v7x 64 MiB).
    vmem_budget = 28 * 1024 * 1024
    while _vmem_bytes(tb, tn, E_pad) > vmem_budget and tn > 128:
        tn = max(128, tn // 2)
    while _vmem_bytes(tb, tn, E_pad) > vmem_budget and tb > 16:
        tb = max(16, tb // 2)

    B_pad = _round_up(B, tb)
    C_pad = _round_up(C, tn)

    # ---- wrapper prologue (O(B*E) + O(C*E), done once, in f32) --------------
    # Normalize embedding rows, cast to bf16, zero-pad (zero pad on E does not
    # change norms/dots).
    emb_f32 = emb.astype(jnp.float32)
    inv_en = jax.lax.rsqrt(
        jnp.maximum(jnp.sum(emb_f32 * emb_f32, axis=1, keepdims=True), eps * eps))
    emb_n = (emb_f32 * inv_en).astype(jnp.bfloat16)
    emb_n = jnp.pad(emb_n, ((0, B_pad - B), (0, E_pad - E)))

    # Normalize weight rows in f32, cast to bf16, transpose to (E, C), pad.
    w_f32 = weight.astype(jnp.float32)
    inv_wn = jax.lax.rsqrt(
        jnp.maximum(jnp.sum(w_f32 * w_f32, axis=1, keepdims=True), eps * eps))
    w_n = (w_f32 * inv_wn).astype(jnp.bfloat16)
    w_t = jnp.pad(w_n.T, ((0, E_pad - E), (0, C_pad - C)))

    # Padded rows get label -1 so they never match any (non-negative) class id.
    label2d = jnp.pad(label.astype(jnp.int32).reshape(B, 1),
                      ((0, B_pad - B), (0, 0)), constant_values=-1)

    n_class_tiles = C_pad // tn
    n_batch_tiles = B_pad // tb
    grid = (n_class_tiles, n_batch_tiles)   # class OUTER, batch INNER

    kernel = functools.partial(
        _arcface_kernel,
        scale=float(scale),
        cos_m=math.cos(m),
        sin_m=math.sin(m),
        th=math.cos(math.pi - m),
        mm=math.sin(math.pi - m) * m,
        block_c=tn,
    )

    cost = pl.CostEstimate(
        flops=2 * B_pad * E_pad * C_pad + 4 * B_pad * C_pad,
        transcendentals=B_pad * n_class_tiles,
        bytes_accessed=(B_pad * E_pad * 2 * n_class_tiles   # emb (re-read per class tile)
                        + C_pad * E_pad * 2                  # weight (read once)
                        + B_pad * 4 * n_class_tiles          # labels
                        + B_pad * C_pad * 4),                # output (f32)
    )

    out = pl.pallas_call(
        kernel,
        out_shape=jax.ShapeDtypeStruct((B_pad, C_pad), jnp.float32),
        grid_spec=pltpu.PrefetchScalarGridSpec(
            num_scalar_prefetch=0,
            grid=grid,
            in_specs=[
                pl.BlockSpec((tb, E_pad), lambda j, i: (i, 0)),   # emb tile
                pl.BlockSpec((E_pad, tn), lambda j, i: (0, j)),   # W^T tile (only j)
                pl.BlockSpec((tb, 1), lambda j, i: (i, 0)),       # labels
            ],
            out_specs=pl.BlockSpec((tb, tn), lambda j, i: (i, j)),
        ),
        compiler_params=pltpu.CompilerParams(
            dimension_semantics=("parallel", "parallel"),
            vmem_limit_bytes=32 * 1024 * 1024,
        ),
        cost_estimate=cost,
    )(emb_n, w_t, label2d)

    if B_pad == B and C_pad == C:
        return out
    return out[:B, :C]


def _reference(emb, weight, label, *, scale=64, m=0.5, eps=1e-12):
    emb_n = emb / jnp.maximum(jnp.linalg.norm(emb, axis=1, keepdims=True), eps)
    w_n = weight / jnp.maximum(jnp.linalg.norm(weight, axis=1, keepdims=True), eps)
    cosine = emb_n @ w_n.T
    sine = jnp.sqrt(jnp.clip(1.0 - cosine ** 2, 0.0, 1.0))
    phi = cosine * math.cos(m) - sine * math.sin(m)
    phi = jnp.where(cosine > math.cos(math.pi - m), phi,
                    cosine - math.sin(math.pi - m) * m)
    one_hot = jax.nn.one_hot(label, cosine.shape[1], dtype=cosine.dtype)
    return scale * (one_hot * phi + (1.0 - one_hot) * cosine)


if __name__ == "__main__":
    scale, m = 64, 0.5
    key = jax.random.PRNGKey(0)
    k_emb, k_w, k_lab, k_emb2, k_w2, k_lab2 = jax.random.split(key, 6)

    # --- aligned case: exercises a (2 class-tiles, 3 batch-tiles) grid -------
    B, E, C = 48, 256, 512
    emb = jax.random.normal(k_emb, (B, E), dtype=jnp.float32)
    limit = math.sqrt(6.0 / (E + C))
    weight = jax.random.uniform(k_w, (C, E), minval=-limit, maxval=limit,
                                dtype=jnp.float32)
    label = jax.random.randint(k_lab, (B,), 0, C, dtype=jnp.int32)

    out = margin_head_forward(emb, weight, label, scale=scale, m=m,
                              block_b=16, block_c=256)
    out = jax.block_until_ready(out)
    ref = _reference(emb, weight, label, scale=scale, m=m)
    assert out.shape == (B, C)
    # bf16 matmul (f32 accumulate) at scale=64 -> allow a few tenths absolute.
    assert jnp.allclose(out, ref, atol=0.5, rtol=1e-2)

    # --- unaligned case: exercises padding + global class-id masking ---------
    B2, E2, C2 = 5, 200, 300
    emb2 = jax.random.normal(k_emb2, (B2, E2), dtype=jnp.float32)
    limit2 = math.sqrt(6.0 / (E2 + C2))
    weight2 = jax.random.uniform(k_w2, (C2, E2), minval=-limit2, maxval=limit2,
                                 dtype=jnp.float32)
    label2 = jax.random.randint(k_lab2, (B2,), 0, C2, dtype=jnp.int32)

    out2 = margin_head_forward(emb2, weight2, label2, scale=scale, m=m,
                               block_b=16, block_c=256)
    out2 = jax.block_until_ready(out2)
    ref2 = _reference(emb2, weight2, label2, scale=scale, m=m)
    assert out2.shape == (B2, C2)
    assert jnp.allclose(out2, ref2, atol=0.5, rtol=1e-2)

    # --- default (large-tile) config on the same data ------------------------
    out3 = jax.block_until_ready(
        margin_head_forward(emb, weight, label, scale=scale, m=m))
    assert jnp.allclose(out3, ref, atol=0.5, rtol=1e-2)

    # label=None path of MarginHead.forward
    assert margin_head_forward(emb, weight, None) is None

    print("KERNEL_OK")
</pallas_src>

<mosaic_0001>
module attributes {stable_mosaic.version = 11 : i64} {
  func.func @_arcface_kernel(%arg0: i32, %arg1: i32, %arg2: memref<16x256xbf16, #tpu.memory_space<vmem>>, %arg3: memref<256x256xbf16, #tpu.memory_space<vmem>>, %arg4: memref<16x1xi32, #tpu.memory_space<vmem>>, %arg5: memref<16x256xf32, #tpu.memory_space<vmem>>) attributes {dimension_semantics = [#tpu.dimension_semantics<parallel>, #tpu.dimension_semantics<parallel>], iteration_bounds = array<i64: 2, 3>, scalar_prefetch = 0 : i64, scratch_operands = 0 : i64, tpu.core_type = #tpu.core_type<tc>, window_params = [{transform_indices = @transform_0, window_bounds = array<i64: 16, 256>}, {transform_indices = @transform_1, window_bounds = array<i64: 256, 256>}, {transform_indices = @transform_2, window_bounds = array<i64: 16, 1>}, {transform_indices = @transform_3, window_bounds = array<i64: 16, 256>}]} {
    %c0 = arith.constant 0 : index
    %c0_0 = arith.constant 0 : index
    %0 = vector.load %arg2[%c0, %c0_0] : memref<16x256xbf16, #tpu.memory_space<vmem>>, vector<16x256xbf16>
    %c0_1 = arith.constant 0 : index
    %c0_2 = arith.constant 0 : index
    %1 = vector.load %arg3[%c0_1, %c0_2] : memref<256x256xbf16, #tpu.memory_space<vmem>>, vector<256x256xbf16>
    %cst = arith.constant dense<0.000000e+00> : vector<16x256xf32>
    %2 = tpu.matmul %0, %1, %cst {dimension_numbers = #tpu.dot_dimension_numbers<[1], [0], [0], [1], [0, 0, 1, 1], [], []>} : vector<16x256xbf16>, vector<256x256xbf16>, vector<16x256xf32> -> vector<16x256xf32>
    %c256_i32 = arith.constant 256 : i32
    %3 = arith.muli %arg0, %c256_i32 : i32
    %4 = tpu.iota {dimensions = array<i32: 1>} : vector<16x256xi32>
    %5 = vector.broadcast %3 : i32 to vector<16x256xi32>
    %6 = arith.addi %5, %4 : vector<16x256xi32>
    %c0_3 = arith.constant 0 : index
    %c0_4 = arith.constant 0 : index
    %7 = vector.load %arg4[%c0_3, %c0_4] : memref<16x1xi32, #tpu.memory_space<vmem>>, vector<16x1xi32>
    %8 = vector.broadcast %7 : vector<16x1xi32> to vector<16x256xi32>
    %9 = arith.cmpi eq, %6, %8 : vector<16x256xi32>
    %cst_5 = arith.constant 0.000000e+00 : f32
    %10 = vector.broadcast %cst_5 : f32 to vector<16x256xf32>
    %11 = arith.select %9, %2, %10 : vector<16x256xi1>, vector<16x256xf32>
    %cst_6 = arith.constant dense<0.000000e+00> : vector<16xf32>
    %12 = vector.multi_reduction <add>, %11, %cst_6 [1] : vector<16x256xf32> to vector<16xf32>
    %13 = vector.shape_cast %12 : vector<16xf32> to vector<16x1xf32>
    %14 = arith.mulf %13, %13 : vector<16x1xf32>
    %cst_7 = arith.constant 1.000000e+00 : f32
    %15 = vector.broadcast %cst_7 : f32 to vector<16x1xf32>
    %16 = arith.subf %15, %14 : vector<16x1xf32>
    %cst_8 = arith.constant 0.000000e+00 : f32
    %17 = vector.broadcast %cst_8 : f32 to vector<16x1xf32>
    %18 = arith.maximumf %16, %17 : vector<16x1xf32>
    %19 = math.sqrt %18 : vector<16x1xf32>
    %cst_9 = arith.constant 0.87758255 : f32
    %20 = vector.broadcast %cst_9 : f32 to vector<16x1xf32>
    %21 = arith.mulf %13, %20 : vector<16x1xf32>
    %cst_10 = arith.constant 0.47942555 : f32
    %22 = vector.broadcast %cst_10 : f32 to vector<16x1xf32>
    %23 = arith.mulf %19, %22 : vector<16x1xf32>
    %24 = arith.subf %21, %23 : vector<16x1xf32>
    %cst_11 = arith.constant -0.87758255 : f32
    %25 = vector.broadcast %cst_11 : f32 to vector<16x1xf32>
    %26 = arith.cmpf ogt, %13, %25 : vector<16x1xf32>
    %cst_12 = arith.constant 0.239712775 : f32
    %27 = vector.broadcast %cst_12 : f32 to vector<16x1xf32>
    %28 = arith.subf %13, %27 : vector<16x1xf32>
    %29 = arith.select %26, %24, %28 : vector<16x1xi1>, vector<16x1xf32>
    %30 = vector.shape_cast %29 : vector<16x1xf32> to vector<16x1xf32>
    %31 = vector.broadcast %30 : vector<16x1xf32> to vector<16x256xf32>
    %32 = arith.select %9, %31, %2 : vector<16x256xi1>, vector<16x256xf32>
    %cst_13 = arith.constant 6.400000e+01 : f32
    %33 = vector.broadcast %cst_13 : f32 to vector<16x256xf32>
    %34 = arith.mulf %33, %32 : vector<16x256xf32>
    %c0_14 = arith.constant 0 : index
    %c0_15 = arith.constant 0 : index
    %35 = vector.load %arg5[%c0_14, %c0_15] : memref<16x256xf32, #tpu.memory_space<vmem>>, vector<16x256xf32>
    tpu.vector_store %arg5[%c0_14, %c0_15], %34 {strides = array<i32>} : memref<16x256xf32, #tpu.memory_space<vmem>>, vector<16x256xf32>,
    return
  }
  func.func @transform_0(%arg0: i32, %arg1: i32) -> (i32, i32) {
    %c0_i32 = arith.constant 0 : i32
    %c0_i32_0 = arith.constant 0 : i32
    return %arg1, %c0_i32 : i32, i32
  }
  func.func @transform_1(%arg0: i32, %arg1: i32) -> (i32, i32) {
    %c0_i32 = arith.constant 0 : i32
    %c0_i32_0 = arith.constant 0 : i32
    return %c0_i32, %arg0 : i32, i32
  }
  func.func @transform_2(%arg0: i32, %arg1: i32) -> (i32, i32) {
    %c0_i32 = arith.constant 0 : i32
    %c0_i32_0 = arith.constant 0 : i32
    return %arg1, %c0_i32 : i32, i32
  }
  func.func @transform_3(%arg0: i32, %arg1: i32) -> (i32, i32) {
    %c0_i32 = arith.constant 0 : i32
    return %arg1, %arg0 : i32, i32
  }
}

</mosaic_0001>

<llo_original>
// kernel: tpu_custom_call.1
$region0: #{tpu_custom_call.1}
  #allocation0 [shape = 'u32[]', space=smem, size = 0x4, offset = 0x4, fixed_abs, tag = 'smem constant byte address 0x4 - core index']
  #allocation1 [shape = 'u32[144,128]{1,0:T(1,128)}', space=vmem, size = 0x12000, scoped, tag = 'internal scratch']
  %s0 = inlined_call_operand.vmem [shape: bf16[48,256], index: 0, kind: input, shape index: {}]
  %s1 = inlined_call_operand.hbm [shape: bf16[256,512], index: 1, kind: input, shape index: {}]
  %s2 = inlined_call_operand.vmem [shape: s32[48,1], index: 2, kind: input, shape index: {}]
  %s3 = inlined_call_operand.hbm [shape: f32[48,512], index: 3, kind: output, shape index: {}]
  %s4 = sld [smem:[#allocation0]]
  $region49: #{tpu_custom_call.1} parent=0
    _
  %s6 = ssub.s32 1, %s4
  %s7 = scalar_select 0, %s6, %s4
  $region1: #{tpu_custom_call.1} parent=0
    #allocation2 [shape = 'u8[262144]{0}', space=vmem, size = 0x40000, scoped, tag = 'input window, operand 1']
    #allocation3 [shape = 's32[2]{0}', space=sflag, size = 0x8, scoped, tag = 'scoped memory for tpu_custom_call.1']
    #allocation4 [shape = 's32[2]{0}', space=sflag, size = 0x8, scoped, tag = 'scoped memory for tpu_custom_call.1']
    #allocation5 [shape = 'u8[32768]{0}', space=vmem, size = 0x8000, scoped, tag = 'output window, operand 0']
    %8 = vsyncpa [#allocation3], 0
    %s9 = scalar_lea.sflag [#allocation3], 1
    %10 = vsyncpa %s9, 0
    %11 = vsyncpa [#allocation4], 0
    %s12 = scalar_lea.sflag [#allocation4], 1
    %13 = vsyncpa %s12, 0
    loop: start=0, step=1, limit=8
    $region2: #{tpu_custom_call.1} parent=1 // loop_pre_header
      _
    $region3: #{tpu_custom_call.1} parent=1 // loop_header
      %s15 = sphi 0, %s19
      %p16 = scmp.ge.s32.totalorder %s15, 8
      %s22 = sphi 0, %s34
      %s23 = sphi 0, %s30
      %s24 = sphi 0, %s22
      %s25 = sphi 0, %s23
      %s26 = sphi 0, %s24
      %s27 = sphi 0, %s25
      %s37 = sphi 0, %s39
      %s40 = sphi 0, %s37
      %s41 = sphi 0, %s40
      %s57 = sphi 0, %s41
      %s63 = sphi 0, %s65
      %s66 = sphi 0, %s63
      %s67 = sphi 0, %s66
      %s83 = sphi 0, %s67
      %s89 = sphi 0, %s91
      %s92 = sphi 0, %s89
      %s93 = sphi 0, %s92
      %s109 = sphi 0, %s93
      %s117 = sphi 0, %s119
      %s120 = sphi 0, %s117
      %s121 = sphi 0, %s120
      %s137 = sphi 0, %s121
    $region4: #{tpu_custom_call.1} parent=1 // loop_header_branch
      %18 = sbr.rel (%p16) target = $region8
    $region5: #{tpu_custom_call.1} parent=1 // loop_body
      %s20 = ssub.s32 %s15, 1
      %s21 = ssub.s32 %s15, 2
      %s28 = sadd.s32 1, %s23
      %p29 = scmp.ge.s32.totalorder %s28, 3
      %s30 = scalar_select %p29, 0, %s28
      %s31 = sadd.s32 1, %s22
      %s32 = scalar_select %p29, %s31, %s22
      %p33 = scmp.ge.s32.totalorder %s32, 2
      %s34 = scalar_select %p33, 0, %s32
      %s35 = ssub.s32 %s23, %s30
      %p36 = scmp.eq.s32.totalorder %s35, 0
      %s38 = sadd.s32 %s37, 1
      %s39 = scalar_select %p36, %s37, %s38
      %p42 = pneg %p36
      %p43 = scmp.eq.s32.totalorder %s15, 5
      %p44 = por %p42, %p43
      %p45 = scmp.ne.s32.totalorder %s37, %s40
      %p46 = scmp.eq.s32.totalorder %s15, 0
      %p47 = por %p45, %p46
      %p48 = scmp.ne.s32.totalorder %s37, %s40
      %p49 = scmp.eq.s32.totalorder %s20, 5
      %p50 = por %p48, %p49
      %p51 = scmp.ne.s32.totalorder %s40, %s41
      %p52 = scmp.eq.s32.totalorder %s20, 0
      %p53 = por %p51, %p52
      %p54 = scmp.ne.s32.totalorder %s40, %s41
      %p55 = scmp.eq.s32.totalorder %s21, 5
      %p56 = por %p54, %p55
      %p58 = scmp.ne.s32.totalorder %s41, %s57
      %p59 = scmp.eq.s32.totalorder %s21, 0
      %p60 = por %p58, %p59
      %s61 = ssub.s32 %s22, %s34
      %p62 = scmp.eq.s32.totalorder %s61, 0
      %s64 = sadd.s32 %s63, 1
      %s65 = scalar_select %p62, %s63, %s64
      %p68 = pneg %p62
      %p69 = scmp.eq.s32.totalorder %s15, 5
      %p70 = por %p68, %p69
      %p71 = scmp.ne.s32.totalorder %s63, %s66
      %p72 = scmp.eq.s32.totalorder %s15, 0
      %p73 = por %p71, %p72
      %p74 = scmp.ne.s32.totalorder %s63, %s66
      %p75 = scmp.eq.s32.totalorder %s20, 5
      %p76 = por %p74, %p75
      %p77 = scmp.ne.s32.totalorder %s66, %s67
      %p78 = scmp.eq.s32.totalorder %s20, 0
      %p79 = por %p77, %p78
      %p80 = scmp.ne.s32.totalorder %s66, %s67
      %p81 = scmp.eq.s32.totalorder %s21, 5
      %p82 = por %p80, %p81
      %p84 = scmp.ne.s32.totalorder %s67, %s83
      %p85 = scmp.eq.s32.totalorder %s21, 0
      %p86 = por %p84, %p85
      %s87 = ssub.s32 %s23, %s30
      %p88 = scmp.eq.s32.totalorder %s87, 0
      %s90 = sadd.s32 %s89, 1
      %s91 = scalar_select %p88, %s89, %s90
      %p94 = pneg %p88
      %p95 = scmp.eq.s32.totalorder %s15, 5
      %p96 = por %p94, %p95
      %p97 = scmp.ne.s32.totalorder %s89, %s92
      %p98 = scmp.eq.s32.totalorder %s15, 0
      %p99 = por %p97, %p98
      %p100 = scmp.ne.s32.totalorder %s89, %s92
      %p101 = scmp.eq.s32.totalorder %s20, 5
      %p102 = por %p100, %p101
      %p103 = scmp.ne.s32.totalorder %s92, %s93
      %p104 = scmp.eq.s32.totalorder %s20, 0
      %p105 = por %p103, %p104
      %p106 = scmp.ne.s32.totalorder %s92, %s93
      %p107 = scmp.eq.s32.totalorder %s21, 5
      %p108 = por %p106, %p107
      %p110 = scmp.ne.s32.totalorder %s93, %s109
      %p111 = scmp.eq.s32.totalorder %s21, 0
      %p112 = por %p110, %p111
      %s113 = ssub.s32 %s23, %s30
      %s114 = ssub.s32 %s22, %s34
      %s115 = sor.u32 %s113, %s114
      %p116 = scmp.eq.s32.totalorder %s115, 0
      %s118 = sadd.s32 %s117, 1
      %s119 = scalar_select %p116, %s117, %s118
      %p122 = pneg %p116
      %p123 = scmp.eq.s32.totalorder %s15, 5
      %p124 = por %p122, %p123
      %p125 = scmp.ne.s32.totalorder %s117, %s120
      %p126 = scmp.eq.s32.totalorder %s15, 0
      %p127 = por %p125, %p126
      %p128 = scmp.ne.s32.totalorder %s117, %s120
      %p129 = scmp.eq.s32.totalorder %s20, 5
      %p130 = por %p128, %p129
      %p131 = scmp.ne.s32.totalorder %s120, %s121
      %p132 = scmp.eq.s32.totalorder %s20, 0
      %p133 = por %p131, %p132
      %p134 = scmp.ne.s32.totalorder %s120, %s121
      %p135 = scmp.eq.s32.totalorder %s21, 5
      %p136 = por %p134, %p135
      %p138 = scmp.ne.s32.totalorder %s121, %s137
      %p139 = scmp.eq.s32.totalorder %s21, 0
      %p140 = por %p138, %p139
      %p141 = scmp.le.s32.totalorder 1, %s15
      %p142 = scmp.lt.s32.totalorder %s15, 7
      %p143 = pnand %p141, %p142
      %p144 = pneg %p143
      // Predicated region
      $region9: #{tpu_custom_call.1} parent=5 // pred_check
        _
      $region10: #{tpu_custom_call.1} parent=5 // pred_check_branch
        %146 = sbr.rel (%p143) target = $region12
      $region11: #{tpu_custom_call.1} parent=5 // pred_region
        %s147 = ssub.s32 %s15, 1
      $region12: #{tpu_custom_call.1} parent=5 // pred_fallthru
        _
      %p148 = scmp.lt.s32.totalorder %s15, 6
      // Predicated region
      $region13: #{tpu_custom_call.1} parent=5 // pred_check
        %p149 = pneg %p148
      $region14: #{tpu_custom_call.1} parent=5 // pred_check_branch
        %151 = sbr.rel (%p149) target = $region16
      $region15: #{tpu_custom_call.1} parent=5 // pred_region
        // Predicated region
        $region17: #{tpu_custom_call.1} parent=15 // pred_check
          %p152 = pneg %p47
        $region18: #{tpu_custom_call.1} parent=15 // pred_check_branch
          %154 = sbr.rel (%p152) target = $region20
        $region19: #{tpu_custom_call.1} parent=15 // pred_region
          %s155 = smul.u32 2, %s23
          %p156 = scmp.lt.s32.totalorder %s155, 5
          %s157 = scalar_select %p156, %s155, 5
          %s158 = smul.addr %s157, 2
          %s159 = smul.addr %s158, 4
          %s160 = scalar_lea.vmem %s0, %s159
          %s161 = smul.u32 2, %s23
        $region20: #{tpu_custom_call.1} parent=15 // pred_fallthru
          _
        // Predicated region
        $region21: #{tpu_custom_call.1} parent=15 // pred_check
          %p162 = pneg %p73
        $region22: #{tpu_custom_call.1} parent=15 // pred_check_branch
          %164 = sbr.rel (%p162) target = $region24
        $region23: #{tpu_custom_call.1} parent=15 // pred_region
          %s165 = sand.u32 %s63, 1
          %s166 = scalar_lea.sflag [#allocation3], %s165
          %s167 = sand.u32 %s63, 1
          %s168 = smul.addr %s167, 256
          %s169 = scalar_lea.vmem [#allocation2], %s168
          %s170 = smul.u32 2, %s22
          %s172 = ssub.s32 4096, 4096
          %173 = vsyncadd %s166, %s172
          %s174 = smul.addr %s170, 64
          %s175 = scalar_lea.hbm %s1, %s174
          %s176 = sshll.u32 %s169, 4
          %s177 = int_to_ptr.vmem [resolvable:$true] %s176
          %182 = dma.hbm_to_vmem [thread:$0]  %s175, 4096, %s177, %s166, 256, 128, 8
        $region24: #{tpu_custom_call.1} parent=15 // pred_fallthru
          _
        // Predicated region
        $region25: #{tpu_custom_call.1} parent=15 // pred_check
          %p183 = pneg %p99
        $region26: #{tpu_custom_call.1} parent=15 // pred_check_branch
          %185 = sbr.rel (%p183) target = $region28
        $region27: #{tpu_custom_call.1} parent=15 // pred_region
          %s186 = smul.u32 2, %s23
          %p187 = scmp.lt.s32.totalorder %s186, 5
          %s188 = scalar_select %p187, %s186, 5
          %s189 = smul.addr %s188, 8
          %s190 = scalar_lea.vmem %s2, %s189
          %s191 = smul.u32 2, %s23
        $region28: #{tpu_custom_call.1} parent=15 // pred_fallthru
          _
      $region16: #{tpu_custom_call.1} parent=5 // pred_fallthru
        _
      %p192 = scmp.le.s32.totalorder 1, %s15
      %p193 = scmp.lt.s32.totalorder %s15, 7
      %p194 = pnand %p192, %p193
      %p195 = pneg %p194
      // Predicated region
      $region29: #{tpu_custom_call.1} parent=5 // pred_check
        _
      $region30: #{tpu_custom_call.1} parent=5 // pred_check_branch
        %197 = sbr.rel (%p194) target = $region32
      $region31: #{tpu_custom_call.1} parent=5 // pred_region
        %s198 = ssub.s32 %s15, 1
        %s199 = sand.u32 %s66, 1
        %s200 = scalar_lea.sflag [#allocation3], %s199
        %s201 = sand.u32 %s66, 1
        %s202 = smul.addr %s201, 256
        %s203 = scalar_lea.vmem [#allocation2], %s202
        // Predicated region
        $region33: #{tpu_custom_call.1} parent=31 // pred_check
          %p204 = pneg %p79
        $region34: #{tpu_custom_call.1} parent=31 // pred_check_branch
          %206 = sbr.rel (%p204) target = $region36
        $region35: #{tpu_custom_call.1} parent=31 // pred_region
          %207 = dma.done %s200, 4096
        $region36: #{tpu_custom_call.1} parent=31 // pred_fallthru
          _
        %s208 = smul.u32 2, %s25
        %p209 = scmp.lt.s32.totalorder %s208, 5
        %s210 = scalar_select %p209, %s208, 5
        %s211 = smul.addr %s210, 2
        %s212 = smul.addr %s211, 4
        %s213 = scalar_lea.vmem %s0, %s212
        %p214 = pneg %p53
        %p215 = pneg %p50
        %s216 = sand.u32 %s66, 1
        %s217 = scalar_lea.sflag [#allocation3], %s216
        %s218 = sand.u32 %s66, 1
        %s219 = smul.addr %s218, 256
        %s220 = scalar_lea.vmem [#allocation2], %s219
        %p221 = pneg %p79
        %p222 = pneg %p76
        %s223 = smul.u32 2, %s25
        %p224 = scmp.lt.s32.totalorder %s223, 5
        %s225 = scalar_select %p224, %s223, 5
        %s226 = smul.addr %s225, 8
        %s227 = scalar_lea.vmem %s2, %s226
        %p228 = pneg %p105
        %p229 = pneg %p102
        %p230 = pneg %p133
        %p231 = pneg %p130
        %s232 = sand.u32 %s120, 1
        %s233 = scalar_lea.sflag [#allocation4], %s232
        %s234 = sand.u32 %s120, 1
        %s235 = smul.addr %s234, 32
        %s236 = scalar_lea.vmem [#allocation5], %s235
        %s237 = smul.u32 2, %s25
        %p238 = scmp.lt.s32.totalorder %s237, 5
        %s239 = scalar_select %p238, %s237, 5
        %s240 = smul.addr %s239, 2
        %s241 = smul.addr %s240, 4
        %s242 = scalar_lea.vmem %s0, %s241
        %s243 = smul.u32 2, %s25
        %s244 = smul.u32 2, %s24
        %s245 = smul.u32 2, %s25
        %p246 = scmp.lt.s32.totalorder %s245, 5
        %s247 = scalar_select %p246, %s245, 5
        %s248 = smul.addr %s247, 8
        %s249 = scalar_lea.vmem %s2, %s248
        %s250 = smul.u32 2, %s25
        %s251 = smul.u32 2, %s25
        %s252 = smul.u32 2, %s24
        %v253 = vld [vmem:[%s242] sm:$0xff]
        %v254 = vld [vmem:[%s242 + $0x8] sm:$0xff]
        %v255 = vld [vmem:[%s203] sm:$0xff]
        %v256 = vld [vmem:[%s203 + $0x8] sm:$0xff]
        %v257 = vld [vmem:[%s203 + $0x10] sm:$0xff]
        %v258 = vld [vmem:[%s203 + $0x18] sm:$0xff]
        %v259 = vld [vmem:[%s203 + $0x20] sm:$0xff]
        %v260 = vld [vmem:[%s203 + $0x28] sm:$0xff]
        %v261 = vld [vmem:[%s203 + $0x30] sm:$0xff]
        %v262 = vld [vmem:[%s203 + $0x38] sm:$0xff]
        %v263 = vld [vmem:[%s203 + $0x40] sm:$0xff]
        %v264 = vld [vmem:[%s203 + $0x48] sm:$0xff]
        %v265 = vld [vmem:[%s203 + $0x50] sm:$0xff]
        %v266 = vld [vmem:[%s203 + $0x58] sm:$0xff]
        %v267 = vld [vmem:[%s203 + $0x60] sm:$0xff]
        %v268 = vld [vmem:[%s203 + $0x68] sm:$0xff]
        %v269 = vld [vmem:[%s203 + $0x70] sm:$0xff]
        %v270 = vld [vmem:[%s203 + $0x78] sm:$0xff]
        %v271 = vld [vmem:[%s203 + $0x80] sm:$0xff]
        %v272 = vld [vmem:[%s203 + $0x88] sm:$0xff]
        %v273 = vld [vmem:[%s203 + $0x90] sm:$0xff]
        %v274 = vld [vmem:[%s203 + $0x98] sm:$0xff]
        %v275 = vld [vmem:[%s203 + $0xa0] sm:$0xff]
        %v276 = vld [vmem:[%s203 + $0xa8] sm:$0xff]
        %v277 = vld [vmem:[%s203 + $0xb0] sm:$0xff]
        %v278 = vld [vmem:[%s203 + $0xb8] sm:$0xff]
        %v279 = vld [vmem:[%s203 + $0xc0] sm:$0xff]
        %v280 = vld [vmem:[%s203 + $0xc8] sm:$0xff]
        %v281 = vld [vmem:[%s203 + $0xd0] sm:$0xff]
        %v282 = vld [vmem:[%s203 + $0xd8] sm:$0xff]
        %v283 = vld [vmem:[%s203 + $0xe0] sm:$0xff]
        %v284 = vld [vmem:[%s203 + $0xe8] sm:$0xff]
        %v285 = vld [vmem:[%s203 + $0xf0] sm:$0xff]
        %v286 = vld [vmem:[%s203 + $0xf8] sm:$0xff]
        %v289 = vunpack.c.l.b16 %v253
        %v290 = vunpack.c.h.b16 %v253
        %v291 = vunpack.c.l.b16 %v254
        %v292 = vunpack.c.h.b16 %v254
        %v293 = vpack.c.b16 %v291, %v289
        %v294 = vpack.c.b16 %v292, %v290
        %v329 = vunpack.c.l.b16 %v255
        %v330 = vunpack.c.h.b16 %v255
        %v331 = vunpack.c.l.b16 %v256
        %v332 = vunpack.c.h.b16 %v256
        %v333 = vunpack.c.l.b16 %v257
        %v334 = vunpack.c.h.b16 %v257
        %v335 = vunpack.c.l.b16 %v258
        %v336 = vunpack.c.h.b16 %v258
        %v337 = vunpack.c.l.b16 %v259
        %v338 = vunpack.c.h.b16 %v259
        %v339 = vunpack.c.l.b16 %v260
        %v340 = vunpack.c.h.b16 %v260
        %v341 = vunpack.c.l.b16 %v261
        %v342 = vunpack.c.h.b16 %v261
        %v343 = vunpack.c.l.b16 %v262
        %v344 = vunpack.c.h.b16 %v262
        %v345 = vunpack.c.l.b16 %v263
        %v346 = vunpack.c.h.b16 %v263
        %v347 = vunpack.c.l.b16 %v264
        %v348 = vunpack.c.h.b16 %v264
        %v349 = vunpack.c.l.b16 %v265
        %v350 = vunpack.c.h.b16 %v265
        %v351 = vunpack.c.l.b16 %v266
        %v352 = vunpack.c.h.b16 %v266
        %v353 = vunpack.c.l.b16 %v267
        %v354 = vunpack.c.h.b16 %v267
        %v355 = vunpack.c.l.b16 %v268
        %v356 = vunpack.c.h.b16 %v268
        %v357 = vunpack.c.l.b16 %v269
        %v358 = vunpack.c.h.b16 %v269
        %v359 = vunpack.c.l.b16 %v270
        %v360 = vunpack.c.h.b16 %v270
        %v361 = vunpack.c.l.b16 %v271
        %v362 = vunpack.c.h.b16 %v271
        %v363 = vunpack.c.l.b16 %v272
        %v364 = vunpack.c.h.b16 %v272
        %v365 = vunpack.c.l.b16 %v273
        %v366 = vunpack.c.h.b16 %v273
        %v367 = vunpack.c.l.b16 %v274
        %v368 = vunpack.c.h.b16 %v274
        %v369 = vunpack.c.l.b16 %v275
        %v370 = vunpack.c.h.b16 %v275
        %v371 = vunpack.c.l.b16 %v276
        %v372 = vunpack.c.h.b16 %v276
        %v373 = vunpack.c.l.b16 %v277
        %v374 = vunpack.c.h.b16 %v277
        %v375 = vunpack.c.l.b16 %v278
        %v376 = vunpack.c.h.b16 %v278
        %v377 = vunpack.c.l.b16 %v279
        %v378 = vunpack.c.h.b16 %v279
        %v379 = vunpack.c.l.b16 %v280
        %v380 = vunpack.c.h.b16 %v280
        %v381 = vunpack.c.l.b16 %v281
        %v382 = vunpack.c.h.b16 %v281
        %v383 = vunpack.c.l.b16 %v282
        %v384 = vunpack.c.h.b16 %v282
        %v385 = vunpack.c.l.b16 %v283
        %v386 = vunpack.c.h.b16 %v283
        %v387 = vunpack.c.l.b16 %v284
        %v388 = vunpack.c.h.b16 %v284
        %v389 = vunpack.c.l.b16 %v285
        %v390 = vunpack.c.h.b16 %v285
        %v391 = vunpack.c.l.b16 %v286
        %v392 = vunpack.c.h.b16 %v286
        %v393 = vpack.c.b16 %v331, %v329
        %v394 = vpack.c.b16 %v332, %v330
        %v395 = vpack.c.b16 %v335, %v333
        %v396 = vpack.c.b16 %v336, %v334
        %v397 = vpack.c.b16 %v339, %v337
        %v398 = vpack.c.b16 %v340, %v338
        %v399 = vpack.c.b16 %v343, %v341
        %v400 = vpack.c.b16 %v344, %v342
        %v401 = vpack.c.b16 %v347, %v345
        %v402 = vpack.c.b16 %v348, %v346
        %v403 = vpack.c.b16 %v351, %v349
        %v404 = vpack.c.b16 %v352, %v350
        %v405 = vpack.c.b16 %v355, %v353
        %v406 = vpack.c.b16 %v356, %v354
        %v407 = vpack.c.b16 %v359, %v357
        %v408 = vpack.c.b16 %v360, %v358
        %v409 = vpack.c.b16 %v363, %v361
        %v410 = vpack.c.b16 %v364, %v362
        %v411 = vpack.c.b16 %v367, %v365
        %v412 = vpack.c.b16 %v368, %v366
        %v413 = vpack.c.b16 %v371, %v369
        %v414 = vpack.c.b16 %v372, %v370
        %v415 = vpack.c.b16 %v375, %v373
        %v416 = vpack.c.b16 %v376, %v374
        %v417 = vpack.c.b16 %v379, %v377
        %v418 = vpack.c.b16 %v380, %v378
        %v419 = vpack.c.b16 %v383, %v381
        %v420 = vpack.c.b16 %v384, %v382
        %v421 = vpack.c.b16 %v387, %v385
        %v422 = vpack.c.b16 %v388, %v386
        %v423 = vpack.c.b16 %v391, %v389
        %v424 = vpack.c.b16 %v392, %v390
        %457 = vmatprep.subr.bf16.mxu0 %v408
        %458 = vmatpush1.bf16.msra.mxu0 %v407
        %459 = vmatprep.subr.bf16.mxu0 %v406
        %460 = vmatpush1.bf16.msra.mxu0 %v405
        %461 = vmatprep.subr.bf16.mxu0 %v404
        %462 = vmatpush1.bf16.msra.mxu0 %v403
        %463 = vmatprep.subr.bf16.mxu0 %v402
        %464 = vmatpush1.bf16.msra.mxu0 %v401
        %465 = vmatprep.subr.bf16.mxu0 %v400
        %466 = vmatpush1.bf16.msra.mxu0 %v399
        %467 = vmatprep.subr.bf16.mxu0 %v398
        %468 = vmatpush1.bf16.msra.mxu0 %v397
        %469 = vmatprep.subr.bf16.mxu0 %v396
        %470 = vmatpush1.bf16.msra.mxu0 %v395
        %471 = vmatprep.subr.bf16.mxu0 %v394
        %472 = vmatpush1.bf16.msra.mxu0 %v393
        %473 = vmatprep.subr.bf16.mxu0 %v424
        %474 = vmatpush2.bf16.msra.mxu0 %v423
        %475 = vmatprep.subr.bf16.mxu0 %v422
        %476 = vmatpush2.bf16.msra.mxu0 %v421
        %477 = vmatprep.subr.bf16.mxu0 %v420
        %478 = vmatpush2.bf16.msra.mxu0 %v419
        %479 = vmatprep.subr.bf16.mxu0 %v418
        %480 = vmatpush2.bf16.msra.mxu0 %v417
        %481 = vmatprep.subr.bf16.mxu0 %v416
        %482 = vmatpush2.bf16.msra.mxu0 %v415
        %483 = vmatprep.subr.bf16.mxu0 %v414
        %484 = vmatpush2.bf16.msra.mxu0 %v413
        %485 = vmatprep.subr.bf16.mxu0 %v412
        %486 = vmatpush2.bf16.msra.mxu0 %v411
        %487 = vmatprep.subr.bf16.mxu0 %v410
        %488 = vmatpush2.bf16.msra.mxu0 %v409
        %489 = vmatprep.mubr.bf16.mxu0 %v294
        %490 = vmatmul.mubr.bf16.gmra.mxu0 %v293
        %v491 = vpop.f32.mrf.mxu0
        %v492 = vadd.f32 0.0, %v491
        %v493 = vpop.f32.mrf.mxu0
        %v494 = vadd.f32 0.0, %v493
        %v495 = vpop.f32.mrf.mxu0
        %v496 = vadd.f32 0.0, %v495
        %v497 = vpop.f32.mrf.mxu0
        %v498 = vadd.f32 0.0, %v497
        %499 = vdwg.mxu0
        %s500 = smul.u32 %s24, 256
        %v501 = vlaneseq
        %v502 = vand.u32 %v501, 127
        %v503 = vadd.s32 %v502, 128
        %v504 = vstv %s500
        %v505 = vadd.s32 %v504, %v502
        %v506 = vadd.s32 %v504, %v503
        %v507 = vld [vmem:[%s249] sm:$0xff]
        %v508 = vld [vmem:[%s249 + $0x8] sm:$0xff]
        %509 = vset.pattern.permute.xlu0 0
        %510 = vperm.xlu0 %509, %v507
        %v511 = vpop.permute.xlu0 %510
        %512 = vset.pattern.permute.xlu0 0
        %513 = vperm.xlu0 %512, %v508
        %v514 = vpop.permute.xlu0 %513
        %vm515 = vcmp.eq.s32.totalorder %v505, %v511
        %vm516 = vcmp.eq.s32.totalorder %v506, %v511
        %vm517 = vcmp.eq.s32.totalorder %v505, %v514
        %vm518 = vcmp.eq.s32.totalorder %v506, %v514
        %v519 = vsel %vm515, %v492, 0.0
        %v520 = vsel %vm516, %v494, 0.0
        %v521 = vsel %vm517, %v496, 0.0
        %v522 = vsel %vm518, %v498, 0.0
        %v523 = vadd.f32 %v519, %v520
        %524 = vadd.xlane.f32.xlu0 %v523
        %v525 = vpop.xlane.xlu0 %524
        %v526 = vadd.f32 %v521, %v522
        %527 = vadd.xlane.f32.xlu0 %v526
        %v528 = vpop.xlane.xlu0 %527
        %v529 = vmul.f32 %v525, %v525
        %v530 = vmul.f32 %v528, %v528
        %v531 = vsub.f32 1.0, %v529
        %v532 = vsub.f32 1.0, %v530
        %v533 = vmax.f32 %v531, 0.0
        %v534 = vmax.f32 %v532, 0.0
        %v535 = vrsqrt.pop %v533
        %v536 = vmul.f32 %v533, %v535
        %vm537 = vcmp.eq.f32.partialorder %v533, inf
        %v538 = vsel %vm537, %v533, %v536
        %vm539 = vcmp.eq.f32.partialorder %v533, 0.0
        %v540 = vand.u32 %v533, 2147483648
        %v541 = vsel %vm539, %v540, %v538
        %v542 = vrsqrt.pop %v534
        %v543 = vmul.f32 %v534, %v542
        %vm544 = vcmp.eq.f32.partialorder %v534, inf
        %v545 = vsel %vm544, %v534, %v543
        %vm546 = vcmp.eq.f32.partialorder %v534, 0.0
        %v547 = vand.u32 %v534, 2147483648
        %v548 = vsel %vm546, %v547, %v545
        %v549 = vmul.f32 %v525, 0.87758255
        %v550 = vmul.f32 %v528, 0.87758255
        %v551 = vmul.f32 %v541, 0.47942555
        %v552 = vmul.f32 %v548, 0.47942555
        %v553 = vsub.f32 %v549, %v551
        %v554 = vsub.f32 %v550, %v552
        %vm555 = vcmp.gt.f32.partialorder %v525, -0.87758255
        %vm556 = vcmp.gt.f32.partialorder %v528, -0.87758255
        %v557 = vsub.f32 %v525, 0.23971277
        %v558 = vsub.f32 %v528, 0.23971277
        %v559 = vsel %vm555, %v553, %v557
        %v560 = vsel %vm556, %v554, %v558
        %v561 = vsel %vm515, %v559, %v492
        %v562 = vsel %vm516, %v559, %v494
        %v563 = vsel %vm517, %v560, %v496
        %v564 = vsel %vm518, %v560, %v498
        %v565 = vmul.f32 %v561, 64.0
        %v566 = vmul.f32 %v562, 64.0
        %v567 = vmul.f32 %v563, 64.0
        %v568 = vmul.f32 %v564, 64.0
        %569 = vst [vmem:[%s236] sm:$0xff] %v565
        %570 = vst [vmem:[%s236 + $0x8] sm:$0xff] %v566
        %571 = vst [vmem:[%s236 + $0x10] sm:$0xff] %v567
        %572 = vst [vmem:[%s236 + $0x18] sm:$0xff] %v568
        %s573 = sand.u32 %s120, 1
        %s574 = scalar_lea.sflag [#allocation4], %s573
        %s575 = sand.u32 %s120, 1
        %s576 = smul.addr %s575, 32
        %s577 = scalar_lea.vmem [#allocation5], %s576
        // Predicated region
        $region37: #{tpu_custom_call.1} parent=31 // pred_check
          %p578 = pneg %p130
        $region38: #{tpu_custom_call.1} parent=31 // pred_check_branch
          %580 = sbr.rel (%p578) target = $region40
        $region39: #{tpu_custom_call.1} parent=31 // pred_region
          %s581 = smul.u32 2, %s25
          %s582 = smul.u32 2, %s24
          %s584 = ssub.s32 512, 512
          %585 = vsyncadd %s574, %s584
          %s586 = smul.addr %s581, 4
          %s587 = sadd.s32 %s582, %s586
          %s588 = smul.addr %s587, 128
          %s589 = scalar_lea.hbm %s3, %s588
          %s590 = sshll.u32 %s577, 4
          %s591 = int_to_ptr.vmem [resolvable:$true] %s590
          %596 = dma.vmem_to_hbm [thread:$0]  %s591, 512, %s589, %s574, 256, 512, 16
        $region40: #{tpu_custom_call.1} parent=31 // pred_fallthru
          _
      $region32: #{tpu_custom_call.1} parent=5 // pred_fallthru
        _
      %p597 = scmp.le.s32.totalorder 2, %s15
      // Predicated region
      $region41: #{tpu_custom_call.1} parent=5 // pred_check
        %p598 = pneg %p597
      $region42: #{tpu_custom_call.1} parent=5 // pred_check_branch
        %600 = sbr.rel (%p598) target = $region44
      $region43: #{tpu_custom_call.1} parent=5 // pred_region
        %s601 = ssub.s32 %s15, 2
        // Predicated region
        $region45: #{tpu_custom_call.1} parent=43 // pred_check
          %p602 = pneg %p136
        $region46: #{tpu_custom_call.1} parent=43 // pred_check_branch
          %604 = sbr.rel (%p602) target = $region48
        $region47: #{tpu_custom_call.1} parent=43 // pred_region
          %s605 = sand.u32 %s121, 1
          %s606 = scalar_lea.sflag [#allocation4], %s605
          %s607 = sand.u32 %s121, 1
          %s608 = smul.addr %s607, 32
          %s609 = scalar_lea.vmem [#allocation5], %s608
          %610 = dma.done %s606, 512
        $region48: #{tpu_custom_call.1} parent=43 // pred_fallthru
          _
      $region44: #{tpu_custom_call.1} parent=5 // pred_fallthru
        _
    $region6: #{tpu_custom_call.1} parent=1 // loop_footer
      %s19 = sadd.s32 1, %s15
    $region7: #{tpu_custom_call.1} parent=1 // loop_footer_branch
      %14 = sbr.rel target = $region3
    $region8: #{tpu_custom_call.1} parent=1 // loop_exit
      _
    %611 = vsyncpa [#allocation3], 1
    %s612 = scalar_lea.sflag [#allocation3], 1
    %613 = vsyncpa %s612, 1
    %614 = vsyncpa [#allocation4], 1
    %s615 = scalar_lea.sflag [#allocation4], 1
    %616 = vsyncpa %s615, 1

</llo_original>
